<compile_context>
chip_gen: v6e
topology: v6e:2x2x1
jax: 0.10.0
libtpu: 0.0.40
codegen_flags: <defaults>
</compile_context>

<pallas_src>
import jax
import jax.numpy as jnp
from jax.experimental import pallas as pl
from jax.experimental.pallas import tpu as pltpu

# Output elements per grid step (f32): 256K elems = 1 MiB output tile and
# 2 MiB (both channels) input tile.  With default double buffering the total
# resident VMEM is ~6 MiB -- safe on v5e/v6e/v7x and on the HBM roofline
# plateau (512^2-element tiles already reach ~85% of roofline).
_MAX_TILE_ELEMS = 256 * 1024


def _phase_remove_kernel(x_ref, out_ref):
    # x_ref:   (tb, 2, th, W)   channel 0 = real, channel 1 = imag
    # out_ref: (tb, 1, th, W)
    # Static slices of the ref view -> only the needed sub-block is loaded;
    # the channel axis is a leading dim, so every loaded vreg is dense.
    re = x_ref[:, 0:1, :, :].astype(jnp.float32)  # f32 compute (v5e VPU: no bf16)
    im = x_ref[:, 1:2, :, :].astype(jnp.float32)
    out_ref[...] = jnp.sqrt(re * re + im * im).astype(out_ref.dtype)


def phase_remove(x):
    """x: (B, 2, H, W) NCHW, channel 0 = real, channel 1 = imag.

    Returns (B, 1, H, W) magnitude (phase removed)."""
    B, C, H, W = x.shape
    assert C == 2, "PhaseRemove expects 2 channels (real, imag)"

    # ---- tile selection ----------------------------------------------------
    # Lane dim: always full W (block dim equal to the full array dim is always
    # legal, even if W is not a multiple of 128).
    # Sublane dim: th must be a multiple of 8, or the full H.
    if H % 8 == 0:
        th = (_MAX_TILE_ELEMS // max(W, 1)) // 8 * 8
        th = min(H, max(8, th))
    else:
        th = H  # only legal block size along H in this case

    per_b = th * W                              # output elems per batch element
    tb = min(B, max(1, _MAX_TILE_ELEMS // max(per_b, 1)))

    grid_b = pl.cdiv(B, tb)
    grid_h = pl.cdiv(H, th)

    # Guarantee >= 2 grid steps along a parallel axis when the shape allows,
    # so v7x's two TensorCores both get work.
    if grid_b * grid_h < 2:
        if B >= 2:
            tb = max(1, tb // 2)
        elif H % 8 == 0 and th >= 16:
            th = max(8, (th // 2) // 8 * 8)
        grid_b = pl.cdiv(B, tb)
        grid_h = pl.cdiv(H, th)

    grid = (grid_b, grid_h)

    # ---- pallas_call --------------------------------------------------------
    out = pl.pallas_call(
        _phase_remove_kernel,
        out_shape=jax.ShapeDtypeStruct((B, 1, H, W), x.dtype),
        grid_spec=pltpu.PrefetchScalarGridSpec(
            num_scalar_prefetch=0,
            grid=grid,
            in_specs=[
                # One block carries both channels (full channel dim) -> single
                # HBM pass over the input; channel split happens in VMEM.
                pl.BlockSpec((tb, 2, th, W), lambda bi, hi: (bi, 0, hi, 0)),
            ],
            out_specs=pl.BlockSpec((tb, 1, th, W), lambda bi, hi: (bi, 0, hi, 0)),
        ),
        compiler_params=pltpu.CompilerParams(
            dimension_semantics=("parallel", "parallel"),
        ),
    )(x)

    return out


if __name__ == "__main__":
    key = jax.random.PRNGKey(0)
    # Small NCHW input consistent with the (inferred) module contract:
    # batch=2, channels=2 (real/imag), H=16, W=128 (lane-aligned).
    x = jax.random.normal(key, (2, 2, 16, 128), dtype=jnp.float32)

    out = jax.block_until_ready(phase_remove(x))

    # Sanity check against a pure-JAX reference of the inferred semantics.
    ref = jnp.sqrt(x[:, 0:1] ** 2 + x[:, 1:2] ** 2)
    assert out.shape == (2, 1, 16, 128)
    assert jnp.allclose(out, ref, atol=1e-5, rtol=1e-5)

    print("KERNEL_OK")
</pallas_src>

<mosaic_0001>
module attributes {stable_mosaic.version = 11 : i64} {
  func.func @_phase_remove_kernel(%arg0: i32, %arg1: i32, %arg2: memref<1x2x16x128xf32, #tpu.memory_space<vmem>>, %arg3: memref<1x1x16x128xf32, #tpu.memory_space<vmem>>) attributes {dimension_semantics = [#tpu.dimension_semantics<parallel>, #tpu.dimension_semantics<parallel>], iteration_bounds = array<i64: 2, 1>, scalar_prefetch = 0 : i64, scratch_operands = 0 : i64, tpu.core_type = #tpu.core_type<tc>, window_params = [{transform_indices = @transform_0, window_bounds = array<i64: 1, 2, 16, 128>}, {transform_indices = @transform_1, window_bounds = array<i64: 1, 1, 16, 128>}]} {
    %c0 = arith.constant 0 : index
    %c0_0 = arith.constant 0 : index
    %c0_1 = arith.constant 0 : index
    %c0_2 = arith.constant 0 : index
    %0 = vector.load %arg2[%c0, %c0_0, %c0_1, %c0_2] : memref<1x2x16x128xf32, #tpu.memory_space<vmem>>, vector<1x1x16x128xf32>
    %c0_3 = arith.constant 0 : index
    %c1 = arith.constant 1 : index
    %c0_4 = arith.constant 0 : index
    %c0_5 = arith.constant 0 : index
    %1 = vector.load %arg2[%c0_3, %c1, %c0_4, %c0_5] : memref<1x2x16x128xf32, #tpu.memory_space<vmem>>, vector<1x1x16x128xf32>
    %2 = arith.mulf %0, %0 : vector<1x1x16x128xf32>
    %3 = arith.mulf %1, %1 : vector<1x1x16x128xf32>
    %4 = arith.addf %2, %3 : vector<1x1x16x128xf32>
    %5 = math.sqrt %4 : vector<1x1x16x128xf32>
    %c0_6 = arith.constant 0 : index
    %c0_7 = arith.constant 0 : index
    %c0_8 = arith.constant 0 : index
    %c0_9 = arith.constant 0 : index
    %6 = vector.load %arg3[%c0_6, %c0_7, %c0_8, %c0_9] : memref<1x1x16x128xf32, #tpu.memory_space<vmem>>, vector<1x1x16x128xf32>
    tpu.vector_store %arg3[%c0_6, %c0_7, %c0_8, %c0_9], %5 {strides = array<i32>} : memref<1x1x16x128xf32, #tpu.memory_space<vmem>>, vector<1x1x16x128xf32>,
    return
  }
  func.func @transform_0(%arg0: i32, %arg1: i32) -> (i32, i32, i32, i32) {
    %c0_i32 = arith.constant 0 : i32
    %c0_i32_0 = arith.constant 0 : i32
    %c0_i32_1 = arith.constant 0 : i32
    return %arg0, %c0_i32, %arg1, %c0_i32_0 : i32, i32, i32, i32
  }
  func.func @transform_1(%arg0: i32, %arg1: i32) -> (i32, i32, i32, i32) {
    %c0_i32 = arith.constant 0 : i32
    %c0_i32_0 = arith.constant 0 : i32
    %c0_i32_1 = arith.constant 0 : i32
    return %arg0, %c0_i32, %arg1, %c0_i32_0 : i32, i32, i32, i32
  }
}

</mosaic_0001>

<llo_original>
// kernel: tpu_custom_call.1
$region0: #{tpu_custom_call.1}
  #allocation0 [shape = 'u32[]', space=smem, size = 0x4, offset = 0x4, fixed_abs, tag = 'smem constant byte address 0x4 - core index']
  #allocation1 [shape = 'u32[144,128]{1,0:T(1,128)}', space=vmem, size = 0x12000, scoped, tag = 'internal scratch']
  %s0 = inlined_call_operand.hbm [shape: f32[2,2,16,128], index: 0, kind: input, shape index: {}]
  %s1 = inlined_call_operand.hbm [shape: f32[2,1,16,128], index: 1, kind: output, shape index: {}]
  %s2 = sld [smem:[#allocation0]]
  $region41: #{tpu_custom_call.1} parent=0
    _
  %s4 = ssub.s32 1, %s2
  %s5 = scalar_select 0, %s4, %s2
  $region1: #{tpu_custom_call.1} parent=0
    #allocation2 [shape = 'u8[32768]{0}', space=vmem, size = 0x8000, scoped, tag = 'input window, operand 0']
    #allocation3 [shape = 's32[2]{0}', space=sflag, size = 0x8, scoped, tag = 'scoped memory for tpu_custom_call.1']
    #allocation4 [shape = 's32[2]{0}', space=sflag, size = 0x8, scoped, tag = 'scoped memory for tpu_custom_call.1']
    #allocation5 [shape = 'u8[16384]{0}', space=vmem, size = 0x4000, scoped, tag = 'output window, operand 0']
    %6 = vsyncpa [#allocation3], 0
    %s7 = scalar_lea.sflag [#allocation3], 1
    %8 = vsyncpa %s7, 0
    %9 = vsyncpa [#allocation4], 0
    %s10 = scalar_lea.sflag [#allocation4], 1
    %11 = vsyncpa %s10, 0
    loop: start=0, step=1, limit=4
    $region2: #{tpu_custom_call.1} parent=1 // loop_pre_header
      _
    $region3: #{tpu_custom_call.1} parent=1 // loop_header
      %s13 = sphi 0, %s17
      %p14 = scmp.ge.s32.totalorder %s13, 4
      %s20 = sphi 0, %s32
      %s21 = sphi 0, %s28
      %s22 = sphi 0, %s20
      %s23 = sphi 0, %s21
      %s24 = sphi 0, %s22
      %s25 = sphi 0, %s23
      %s37 = sphi 0, %s39
      %s40 = sphi 0, %s37
      %s41 = sphi 0, %s40
      %s57 = sphi 0, %s41
      %s65 = sphi 0, %s67
      %s68 = sphi 0, %s65
      %s69 = sphi 0, %s68
      %s85 = sphi 0, %s69
    $region4: #{tpu_custom_call.1} parent=1 // loop_header_branch
      %16 = sbr.rel (%p14) target = $region8
    $region5: #{tpu_custom_call.1} parent=1 // loop_body
      %s18 = ssub.s32 %s13, 1
      %s19 = ssub.s32 %s13, 2
      %s26 = sadd.s32 1, %s21
      %p27 = scmp.ge.s32.totalorder %s26, 1
      %s28 = scalar_select %p27, 0, %s26
      %s29 = sadd.s32 1, %s20
      %s30 = scalar_select %p27, %s29, %s20
      %p31 = scmp.ge.s32.totalorder %s30, 2
      %s32 = scalar_select %p31, 0, %s30
      %s33 = ssub.s32 %s20, %s32
      %s34 = ssub.s32 %s21, %s28
      %s35 = sor.u32 %s33, %s34
      %p36 = scmp.eq.s32.totalorder %s35, 0
      %s38 = sadd.s32 %s37, 1
      %s39 = scalar_select %p36, %s37, %s38
      %p42 = pneg %p36
      %p43 = scmp.eq.s32.totalorder %s13, 1
      %p44 = por %p42, %p43
      %p45 = scmp.ne.s32.totalorder %s37, %s40
      %p46 = scmp.eq.s32.totalorder %s13, 0
      %p47 = por %p45, %p46
      %p48 = scmp.ne.s32.totalorder %s37, %s40
      %p49 = scmp.eq.s32.totalorder %s18, 1
      %p50 = por %p48, %p49
      %p51 = scmp.ne.s32.totalorder %s40, %s41
      %p52 = scmp.eq.s32.totalorder %s18, 0
      %p53 = por %p51, %p52
      %p54 = scmp.ne.s32.totalorder %s40, %s41
      %p55 = scmp.eq.s32.totalorder %s19, 1
      %p56 = por %p54, %p55
      %p58 = scmp.ne.s32.totalorder %s41, %s57
      %p59 = scmp.eq.s32.totalorder %s19, 0
      %p60 = por %p58, %p59
      %s61 = ssub.s32 %s20, %s32
      %s62 = ssub.s32 %s21, %s28
      %s63 = sor.u32 %s61, %s62
      %p64 = scmp.eq.s32.totalorder %s63, 0
      %s66 = sadd.s32 %s65, 1
      %s67 = scalar_select %p64, %s65, %s66
      %p70 = pneg %p64
      %p71 = scmp.eq.s32.totalorder %s13, 1
      %p72 = por %p70, %p71
      %p73 = scmp.ne.s32.totalorder %s65, %s68
      %p74 = scmp.eq.s32.totalorder %s13, 0
      %p75 = por %p73, %p74
      %p76 = scmp.ne.s32.totalorder %s65, %s68
      %p77 = scmp.eq.s32.totalorder %s18, 1
      %p78 = por %p76, %p77
      %p79 = scmp.ne.s32.totalorder %s68, %s69
      %p80 = scmp.eq.s32.totalorder %s18, 0
      %p81 = por %p79, %p80
      %p82 = scmp.ne.s32.totalorder %s68, %s69
      %p83 = scmp.eq.s32.totalorder %s19, 1
      %p84 = por %p82, %p83
      %p86 = scmp.ne.s32.totalorder %s69, %s85
      %p87 = scmp.eq.s32.totalorder %s19, 0
      %p88 = por %p86, %p87
      %p89 = scmp.le.s32.totalorder 1, %s13
      %p90 = scmp.lt.s32.totalorder %s13, 3
      %p91 = pnand %p89, %p90
      %p92 = pneg %p91
      // Predicated region
      $region9: #{tpu_custom_call.1} parent=5 // pred_check
        _
      $region10: #{tpu_custom_call.1} parent=5 // pred_check_branch
        %94 = sbr.rel (%p91) target = $region12
      $region11: #{tpu_custom_call.1} parent=5 // pred_region
        %s95 = ssub.s32 %s13, 1
      $region12: #{tpu_custom_call.1} parent=5 // pred_fallthru
        _
      %p96 = scmp.lt.s32.totalorder %s13, 2
      // Predicated region
      $region13: #{tpu_custom_call.1} parent=5 // pred_check
        %p97 = pneg %p96
      $region14: #{tpu_custom_call.1} parent=5 // pred_check_branch
        %99 = sbr.rel (%p97) target = $region16
      $region15: #{tpu_custom_call.1} parent=5 // pred_region
        // Predicated region
        $region17: #{tpu_custom_call.1} parent=15 // pred_check
          %p100 = pneg %p47
        $region18: #{tpu_custom_call.1} parent=15 // pred_check_branch
          %102 = sbr.rel (%p100) target = $region20
        $region19: #{tpu_custom_call.1} parent=15 // pred_region
          %s103 = sand.u32 %s37, 1
          %s104 = scalar_lea.sflag [#allocation3], %s103
          %s105 = sand.u32 %s37, 1
          %s106 = smul.addr %s105, 32
          %s107 = scalar_lea.vmem [#allocation2], %s106
          %s108 = smul.u32 2, %s21
          %s110 = ssub.s32 512, 512
          %111 = vsyncadd %s104, %s110
          %s112 = smul.addr %s20, 4
          %s113 = sadd.s32 %s108, %s112
          %s114 = smul.addr %s113, 128
          %s115 = scalar_lea.hbm %s0, %s114
          %s116 = sshll.u32 %s107, 4
          %s117 = int_to_ptr.vmem [resolvable:$true] %s116
          %122 = dma.hbm_to_vmem [thread:$0]  %s115, 512, %s117, %s104, 128, 128, 8
        $region20: #{tpu_custom_call.1} parent=15 // pred_fallthru
          _
      $region16: #{tpu_custom_call.1} parent=5 // pred_fallthru
        _
      %p123 = scmp.le.s32.totalorder 1, %s13
      %p124 = scmp.lt.s32.totalorder %s13, 3
      %p125 = pnand %p123, %p124
      %p126 = pneg %p125
      // Predicated region
      $region21: #{tpu_custom_call.1} parent=5 // pred_check
        _
      $region22: #{tpu_custom_call.1} parent=5 // pred_check_branch
        %128 = sbr.rel (%p125) target = $region24
      $region23: #{tpu_custom_call.1} parent=5 // pred_region
        %s129 = ssub.s32 %s13, 1
        %s130 = sand.u32 %s40, 1
        %s131 = scalar_lea.sflag [#allocation3], %s130
        %s132 = sand.u32 %s40, 1
        %s133 = smul.addr %s132, 32
        %s134 = scalar_lea.vmem [#allocation2], %s133
        // Predicated region
        $region25: #{tpu_custom_call.1} parent=23 // pred_check
          %p135 = pneg %p53
        $region26: #{tpu_custom_call.1} parent=23 // pred_check_branch
          %137 = sbr.rel (%p135) target = $region28
        $region27: #{tpu_custom_call.1} parent=23 // pred_region
          %138 = dma.done %s131, 512
        $region28: #{tpu_custom_call.1} parent=23 // pred_fallthru
          _
        %s139 = sand.u32 %s40, 1
        %s140 = scalar_lea.sflag [#allocation3], %s139
        %s141 = sand.u32 %s40, 1
        %s142 = smul.addr %s141, 32
        %s143 = scalar_lea.vmem [#allocation2], %s142
        %p144 = pneg %p53
        %p145 = pneg %p50
        %p146 = pneg %p81
        %p147 = pneg %p78
        %s148 = sand.u32 %s68, 1
        %s149 = scalar_lea.sflag [#allocation4], %s148
        %s150 = sand.u32 %s68, 1
        %s151 = smul.addr %s150, 16
        %s152 = scalar_lea.vmem [#allocation5], %s151
        %s153 = smul.u32 2, %s23
        %s154 = smul.u32 2, %s23
        %v155 = vld [vmem:[%s134] sm:$0xff]
        %v156 = vld [vmem:[%s134 + $0x8] sm:$0xff]
        %s157 = scalar_lea.vmem %s134, 16 [#allocation2]
        %v158 = vld [vmem:[%s157] sm:$0xff]
        %v159 = vld [vmem:[%s157 + $0x8] sm:$0xff]
        %v160 = vmul.f32 %v155, %v155
        %v161 = vmul.f32 %v156, %v156
        %v162 = vmul.f32 %v158, %v158
        %v163 = vmul.f32 %v159, %v159
        %v164 = vadd.f32 %v160, %v162
        %v165 = vadd.f32 %v161, %v163
        %v166 = vrsqrt.pop %v164
        %v167 = vmul.f32 %v164, %v166
        %vm168 = vcmp.eq.f32.partialorder %v164, inf
        %v169 = vsel %vm168, %v164, %v167
        %vm170 = vcmp.eq.f32.partialorder %v164, 0.0
        %v171 = vand.u32 %v164, 2147483648
        %v172 = vsel %vm170, %v171, %v169
        %v173 = vrsqrt.pop %v165
        %v174 = vmul.f32 %v165, %v173
        %vm175 = vcmp.eq.f32.partialorder %v165, inf
        %v176 = vsel %vm175, %v165, %v174
        %vm177 = vcmp.eq.f32.partialorder %v165, 0.0
        %v178 = vand.u32 %v165, 2147483648
        %v179 = vsel %vm177, %v178, %v176
        %180 = vst [vmem:[%s152] sm:$0xff] %v172
        %181 = vst [vmem:[%s152 + $0x8] sm:$0xff] %v179
        %s182 = sand.u32 %s68, 1
        %s183 = scalar_lea.sflag [#allocation4], %s182
        %s184 = sand.u32 %s68, 1
        %s185 = smul.addr %s184, 16
        %s186 = scalar_lea.vmem [#allocation5], %s185
        // Predicated region
        $region29: #{tpu_custom_call.1} parent=23 // pred_check
          %p187 = pneg %p78
        $region30: #{tpu_custom_call.1} parent=23 // pred_check_branch
          %189 = sbr.rel (%p187) target = $region32
        $region31: #{tpu_custom_call.1} parent=23 // pred_region
          %s190 = smul.u32 2, %s23
          %s192 = ssub.s32 256, 256
          %193 = vsyncadd %s183, %s192
          %s194 = smul.addr %s22, 2
          %s195 = sadd.s32 %s190, %s194
          %s196 = smul.addr %s195, 128
          %s197 = scalar_lea.hbm %s1, %s196
          %s198 = sshll.u32 %s186, 4
          %s199 = int_to_ptr.vmem [resolvable:$true] %s198
          %204 = dma.vmem_to_hbm [thread:$0]  %s199, 256, %s197, %s183, 128, 128, 8
        $region32: #{tpu_custom_call.1} parent=23 // pred_fallthru
          _
      $region24: #{tpu_custom_call.1} parent=5 // pred_fallthru
        _
      %p205 = scmp.le.s32.totalorder 2, %s13
      // Predicated region
      $region33: #{tpu_custom_call.1} parent=5 // pred_check
        %p206 = pneg %p205
      $region34: #{tpu_custom_call.1} parent=5 // pred_check_branch
        %208 = sbr.rel (%p206) target = $region36
      $region35: #{tpu_custom_call.1} parent=5 // pred_region
        %s209 = ssub.s32 %s13, 2
        // Predicated region
        $region37: #{tpu_custom_call.1} parent=35 // pred_check
          %p210 = pneg %p84
        $region38: #{tpu_custom_call.1} parent=35 // pred_check_branch
          %212 = sbr.rel (%p210) target = $region40
        $region39: #{tpu_custom_call.1} parent=35 // pred_region
          %s213 = sand.u32 %s69, 1
          %s214 = scalar_lea.sflag [#allocation4], %s213
          %s215 = sand.u32 %s69, 1
          %s216 = smul.addr %s215, 16
          %s217 = scalar_lea.vmem [#allocation5], %s216
          %218 = dma.done %s214, 256
        $region40: #{tpu_custom_call.1} parent=35 // pred_fallthru
          _
      $region36: #{tpu_custom_call.1} parent=5 // pred_fallthru
        _
    $region6: #{tpu_custom_call.1} parent=1 // loop_footer
      %s17 = sadd.s32 1, %s13
    $region7: #{tpu_custom_call.1} parent=1 // loop_footer_branch
      %12 = sbr.rel target = $region3
    $region8: #{tpu_custom_call.1} parent=1 // loop_exit
      _
    %219 = vsyncpa [#allocation3], 1
    %s220 = scalar_lea.sflag [#allocation3], 1
    %221 = vsyncpa %s220, 1
    %222 = vsyncpa [#allocation4], 1
    %s223 = scalar_lea.sflag [#allocation4], 1
    %224 = vsyncpa %s223, 1

</llo_original>
